<compile_context>
chip_gen: v7x
topology: tpu7x:2x2x1
jax: 0.10.0
libtpu: 0.0.40
codegen_flags: <defaults>
</compile_context>

<pallas_src>
import jax
import jax.numpy as jnp
from jax.experimental import pallas as pl
from jax.experimental.pallas import tpu as pltpu


def _nmse_kernel(xhat_ref, x_ref, out_ref, pow_acc, mse_acc):
    k = pl.program_id(1)

    @pl.when(k == 0)
    def _init():
        pow_acc[...] = jnp.zeros_like(pow_acc)
        mse_acc[...] = jnp.zeros_like(mse_acc)

    x = x_ref[...].astype(jnp.float32)       # (1, 2, tile)
    xh = xhat_ref[...].astype(jnp.float32)   # (1, 2, tile)

    xc = x - 0.5   # the -0.5 offset only matters for the power term
    d = x - xh     # (x-0.5)-(xh-0.5) == x-xh: no offsets in the diff path

    # Steady-state loop: elementwise multiply-add only (VPU); cross-lane
    # reduction is deferred to the finalize branch so DMA stays the binding
    # slot on all of v5e/v6e/v7x.
    pow_acc[...] += xc * xc
    mse_acc[...] += d * d

    @pl.when(k == pl.num_programs(1) - 1)
    def _finalize():
        power = jnp.sum(pow_acc[...])   # sum over channel + spatial
        mse = jnp.sum(mse_acc[...])
        out_ref[...] = jnp.full(out_ref.shape, mse / power, dtype=out_ref.dtype)


def _pick_tile(hw: int, itemsize: int, max_block_bytes: int) -> int:
    """Largest legal lane tile: multiple of 128 dividing hw (or full hw)."""
    max_tile = max(128, max_block_bytes // (2 * itemsize))  # block = (1,2,tile)
    if hw <= max_tile:
        return hw  # full-extent last dim is always a legal block shape
    t = (max_tile // 128) * 128
    while t >= 128:
        if hw % t == 0:
            return t
        t -= 128
    # No 128-multiple divisor found; fall back to full extent (still legal).
    return hw


def nmse_loss(x_hat: jax.Array, x: jax.Array, reduction: str = "mean",
              *, max_block_bytes: int = 2 * 1024 * 1024) -> jax.Array:
    """NMSELoss.forward(x_hat, x) — returns a scalar.

    x_hat, x: (B, 2, H, W), NCHW layout (channel 0 real, channel 1 imag).
    """
    assert x.shape == x_hat.shape and x.ndim == 4 and x.shape[1] == 2
    b, _, h, w = x.shape
    hw = h * w

    # Flatten in the wrapper (free for contiguous NCHW); no in-kernel reshape
    # -> no VMEM relayout copies.
    xf = x.reshape(b, 2, hw)
    xhf = x_hat.reshape(b, 2, hw)

    itemsize = jnp.dtype(x.dtype).itemsize
    tile = _pick_tile(hw, itemsize, max_block_bytes)
    num_k = hw // tile
    assert tile * num_k == hw

    out = pl.pallas_call(
        _nmse_kernel,
        out_shape=jax.ShapeDtypeStruct((b, 1, 128), jnp.float32),
        grid_spec=pltpu.PrefetchScalarGridSpec(
            num_scalar_prefetch=0,
            grid=(b, num_k),                       # reduction axis last
            in_specs=[
                pl.BlockSpec((1, 2, tile), lambda i, k: (i, 0, k)),  # x_hat
                pl.BlockSpec((1, 2, tile), lambda i, k: (i, 0, k)),  # x
            ],
            # Output block is constant across the reduction axis (accumulator
            # pattern); lane-dense 128-wide block -> unmasked stores.
            out_specs=pl.BlockSpec((1, 1, 128), lambda i, k: (i, 0, 0)),
            scratch_shapes=[
                pltpu.VMEM((1, 2, tile), jnp.float32),   # power accumulator
                pltpu.VMEM((1, 2, tile), jnp.float32),   # mse accumulator
            ],
        ),
        compiler_params=pltpu.CompilerParams(
            dimension_semantics=("parallel", "arbitrary"),
            # Blocks are sized <= ~2 MiB each, so 2 inputs x 2 buffers + two
            # f32 accumulators stay well under 32 MiB on every generation
            # (incl. v7x's 64 MiB physical VMEM); above v5e's 16 MiB default.
            vmem_limit_bytes=32 * 1024 * 1024,
        ),
    )(xhf, xf)

    per_sample = out[:, 0, 0]  # (B,) per-sample NMSE
    # NOTE: division by zero (NaN/Inf) if a sample's centered power is exactly
    # 0 (x == 0.5 everywhere) — matches the PyTorch module's behavior.
    if reduction == "mean":
        return jnp.mean(per_sample)
    return jnp.sum(per_sample)


def _nmse_ref(x_hat, x, reduction="mean"):
    b = x.shape[0]
    x = x.astype(jnp.float32)
    x_hat = x_hat.astype(jnp.float32)
    xr = x[:, 0].reshape(b, -1) - 0.5
    xi = x[:, 1].reshape(b, -1) - 0.5
    hr = x_hat[:, 0].reshape(b, -1) - 0.5
    hi = x_hat[:, 1].reshape(b, -1) - 0.5
    power = jnp.sum(xr**2 + xi**2, axis=1)
    mse = jnp.sum((xr - hr) ** 2 + (xi - hi) ** 2, axis=1)
    nmse = mse / power
    return jnp.mean(nmse) if reduction == "mean" else jnp.sum(nmse)


if __name__ == "__main__":
    key = jax.random.PRNGKey(0)
    k1, k2, k3, k4 = jax.random.split(key, 4)

    # Small shape consistent with the module (channels must be 2: real/imag).
    B, C, H, W = 2, 2, 16, 16
    x = jax.random.uniform(k1, (B, C, H, W), dtype=jnp.float32)
    x_hat = jax.random.uniform(k2, (B, C, H, W), dtype=jnp.float32)

    for red in ("mean", "sum"):
        out = jax.block_until_ready(nmse_loss(x_hat, x, reduction=red))
        ref = jax.block_until_ready(_nmse_ref(x_hat, x, reduction=red))
        assert jnp.allclose(out, ref, rtol=1e-5, atol=1e-6), (red, out, ref)

    # bf16 inputs (halved HBM bytes); kernel upcasts to f32 internally.
    xb, xhb = x.astype(jnp.bfloat16), x_hat.astype(jnp.bfloat16)
    outb = jax.block_until_ready(nmse_loss(xhb, xb, reduction="mean"))
    refb = jax.block_until_ready(_nmse_ref(xhb, xb, reduction="mean"))
    assert jnp.allclose(outb, refb, rtol=1e-5, atol=1e-6), (outb, refb)

    # Larger shape with a forced small block to exercise the gridded
    # (multi-chunk) reduction path and the VMEM accumulators.
    B2, H2, W2 = 4, 32, 64
    x2 = jax.random.uniform(k3, (B2, 2, H2, W2), dtype=jnp.float32)
    xh2 = jax.random.uniform(k4, (B2, 2, H2, W2), dtype=jnp.float32)
    out2 = jax.block_until_ready(
        nmse_loss(xh2, x2, reduction="mean", max_block_bytes=4096))
    ref2 = jax.block_until_ready(_nmse_ref(xh2, x2, reduction="mean"))
    assert jnp.allclose(out2, ref2, rtol=1e-5, atol=1e-6), (out2, ref2)

    print("KERNEL_OK")
</pallas_src>

<mosaic_0001>
module attributes {stable_mosaic.version = 11 : i64} {
  func.func @_nmse_kernel(%arg0: i32, %arg1: i32, %arg2: memref<1x2x256xf32, #tpu.memory_space<vmem>>, %arg3: memref<1x2x256xf32, #tpu.memory_space<vmem>>, %arg4: memref<1x1x128xf32, #tpu.memory_space<vmem>>, %arg5: memref<1x2x256xf32, #tpu.memory_space<vmem>>, %arg6: memref<1x2x256xf32, #tpu.memory_space<vmem>>) attributes {dimension_semantics = [#tpu.dimension_semantics<parallel>, #tpu.dimension_semantics<arbitrary>], iteration_bounds = array<i64: 2, 1>, scalar_prefetch = 0 : i64, scratch_operands = 2 : i64, tpu.core_type = #tpu.core_type<tc>, window_params = [{transform_indices = @transform_0, window_bounds = array<i64: 1, 2, 256>}, {transform_indices = @transform_1, window_bounds = array<i64: 1, 2, 256>}, {transform_indices = @transform_2, window_bounds = array<i64: 1, 1, 128>}]} {
    %c0_i32 = arith.constant 0 : i32
    %0 = arith.cmpi eq, %arg1, %c0_i32 : i32
    %1 = arith.extui %0 : i1 to i32
    %c0_i32_0 = arith.constant 0 : i32
    %2 = arith.cmpi ne, %1, %c0_i32_0 : i32
    scf.if %2 {
      %cst_20 = arith.constant 0.000000e+00 : f32
      %19 = vector.broadcast %cst_20 : f32 to vector<1x2x256xf32>
      %c0_21 = arith.constant 0 : index
      %c0_22 = arith.constant 0 : index
      %c0_23 = arith.constant 0 : index
      %20 = vector.load %arg5[%c0_21, %c0_22, %c0_23] : memref<1x2x256xf32, #tpu.memory_space<vmem>>, vector<1x2x256xf32>
      tpu.vector_store %arg5[%c0_21, %c0_22, %c0_23], %19 {strides = array<i32>} : memref<1x2x256xf32, #tpu.memory_space<vmem>>, vector<1x2x256xf32>,
      %cst_24 = arith.constant 0.000000e+00 : f32
      %21 = vector.broadcast %cst_24 : f32 to vector<1x2x256xf32>
      %c0_25 = arith.constant 0 : index
      %c0_26 = arith.constant 0 : index
      %c0_27 = arith.constant 0 : index
      %22 = vector.load %arg6[%c0_25, %c0_26, %c0_27] : memref<1x2x256xf32, #tpu.memory_space<vmem>>, vector<1x2x256xf32>
      tpu.vector_store %arg6[%c0_25, %c0_26, %c0_27], %21 {strides = array<i32>} : memref<1x2x256xf32, #tpu.memory_space<vmem>>, vector<1x2x256xf32>,
    } else {
    }
    %c0 = arith.constant 0 : index
    %c0_1 = arith.constant 0 : index
    %c0_2 = arith.constant 0 : index
    %3 = vector.load %arg3[%c0, %c0_1, %c0_2] : memref<1x2x256xf32, #tpu.memory_space<vmem>>, vector<1x2x256xf32>
    %c0_3 = arith.constant 0 : index
    %c0_4 = arith.constant 0 : index
    %c0_5 = arith.constant 0 : index
    %4 = vector.load %arg2[%c0_3, %c0_4, %c0_5] : memref<1x2x256xf32, #tpu.memory_space<vmem>>, vector<1x2x256xf32>
    %cst = arith.constant 5.000000e-01 : f32
    %5 = vector.broadcast %cst : f32 to vector<1x2x256xf32>
    %6 = arith.subf %3, %5 : vector<1x2x256xf32>
    %7 = arith.subf %3, %4 : vector<1x2x256xf32>
    %c0_6 = arith.constant 0 : index
    %c0_7 = arith.constant 0 : index
    %c0_8 = arith.constant 0 : index
    %8 = vector.load %arg5[%c0_6, %c0_7, %c0_8] : memref<1x2x256xf32, #tpu.memory_space<vmem>>, vector<1x2x256xf32>
    %9 = arith.mulf %6, %6 : vector<1x2x256xf32>
    %10 = arith.addf %8, %9 : vector<1x2x256xf32>
    %c0_9 = arith.constant 0 : index
    %c0_10 = arith.constant 0 : index
    %c0_11 = arith.constant 0 : index
    %11 = vector.load %arg5[%c0_9, %c0_10, %c0_11] : memref<1x2x256xf32, #tpu.memory_space<vmem>>, vector<1x2x256xf32>
    tpu.vector_store %arg5[%c0_9, %c0_10, %c0_11], %10 {strides = array<i32>} : memref<1x2x256xf32, #tpu.memory_space<vmem>>, vector<1x2x256xf32>,
    %c0_12 = arith.constant 0 : index
    %c0_13 = arith.constant 0 : index
    %c0_14 = arith.constant 0 : index
    %12 = vector.load %arg6[%c0_12, %c0_13, %c0_14] : memref<1x2x256xf32, #tpu.memory_space<vmem>>, vector<1x2x256xf32>
    %13 = arith.mulf %7, %7 : vector<1x2x256xf32>
    %14 = arith.addf %12, %13 : vector<1x2x256xf32>
    %c0_15 = arith.constant 0 : index
    %c0_16 = arith.constant 0 : index
    %c0_17 = arith.constant 0 : index
    %15 = vector.load %arg6[%c0_15, %c0_16, %c0_17] : memref<1x2x256xf32, #tpu.memory_space<vmem>>, vector<1x2x256xf32>
    tpu.vector_store %arg6[%c0_15, %c0_16, %c0_17], %14 {strides = array<i32>} : memref<1x2x256xf32, #tpu.memory_space<vmem>>, vector<1x2x256xf32>,
    %c0_i32_18 = arith.constant 0 : i32
    %16 = arith.cmpi eq, %arg1, %c0_i32_18 : i32
    %17 = arith.extui %16 : i1 to i32
    %c0_i32_19 = arith.constant 0 : i32
    %18 = arith.cmpi ne, %17, %c0_i32_19 : i32
    scf.if %18 {
      %c0_20 = arith.constant 0 : index
      %c0_21 = arith.constant 0 : index
      %c0_22 = arith.constant 0 : index
      %19 = vector.load %arg5[%c0_20, %c0_21, %c0_22] : memref<1x2x256xf32, #tpu.memory_space<vmem>>, vector<1x2x256xf32>
      %20 = vector.shape_cast %19 : vector<1x2x256xf32> to vector<1x1x2x256xf32>
      %cst_23 = arith.constant dense<0.000000e+00> : vector<1xf32>
      %21 = vector.multi_reduction <add>, %20, %cst_23 [1, 2, 3] : vector<1x1x2x256xf32> to vector<1xf32>
      %22 = vector.shape_cast %21 : vector<1xf32> to vector<1x1x1x1xf32>
      %23 = vector.extract %22[0, 0, 0, 0] : f32 from vector<1x1x1x1xf32>
      %c0_24 = arith.constant 0 : index
      %c0_25 = arith.constant 0 : index
      %c0_26 = arith.constant 0 : index
      %24 = vector.load %arg6[%c0_24, %c0_25, %c0_26] : memref<1x2x256xf32, #tpu.memory_space<vmem>>, vector<1x2x256xf32>
      %25 = vector.shape_cast %24 : vector<1x2x256xf32> to vector<1x1x2x256xf32>
      %cst_27 = arith.constant dense<0.000000e+00> : vector<1xf32>
      %26 = vector.multi_reduction <add>, %25, %cst_27 [1, 2, 3] : vector<1x1x2x256xf32> to vector<1xf32>
      %27 = vector.shape_cast %26 : vector<1xf32> to vector<1x1x1x1xf32>
      %28 = vector.extract %27[0, 0, 0, 0] : f32 from vector<1x1x1x1xf32>
      %29 = arith.divf %28, %23 : f32
      %30 = vector.broadcast %29 : f32 to vector<1x1x128xf32>
      %c0_28 = arith.constant 0 : index
      %c0_29 = arith.constant 0 : index
      %c0_30 = arith.constant 0 : index
      %31 = vector.load %arg4[%c0_28, %c0_29, %c0_30] : memref<1x1x128xf32, #tpu.memory_space<vmem>>, vector<1x1x128xf32>
      tpu.vector_store %arg4[%c0_28, %c0_29, %c0_30], %30 {strides = array<i32>} : memref<1x1x128xf32, #tpu.memory_space<vmem>>, vector<1x1x128xf32>,
    } else {
    }
    return
  }
  func.func @transform_0(%arg0: i32, %arg1: i32) -> (i32, i32, i32) {
    %c0_i32 = arith.constant 0 : i32
    %c0_i32_0 = arith.constant 0 : i32
    return %arg0, %c0_i32, %arg1 : i32, i32, i32
  }
  func.func @transform_1(%arg0: i32, %arg1: i32) -> (i32, i32, i32) {
    %c0_i32 = arith.constant 0 : i32
    %c0_i32_0 = arith.constant 0 : i32
    return %arg0, %c0_i32, %arg1 : i32, i32, i32
  }
  func.func @transform_2(%arg0: i32, %arg1: i32) -> (i32, i32, i32) {
    %c0_i32 = arith.constant 0 : i32
    %c0_i32_0 = arith.constant 0 : i32
    %c0_i32_1 = arith.constant 0 : i32
    return %arg0, %c0_i32, %c0_i32_0 : i32, i32, i32
  }
}

</mosaic_0001>

<llo_original>
// kernel: tpu_custom_call.1
$region0: #{tpu_custom_call.1}
  #allocation0 [shape = 'u32[]', space=smem, size = 0x4, offset = 0x4, fixed_abs, tag = 'smem constant byte address 0x4 - core index']
  #allocation1 [shape = 'u32[144,128]{1,0:T(1,128)}', space=vmem, size = 0x12000, scoped, tag = 'internal scratch']
  #allocation2 [shape = 'f32[1,2,256]{2,1,0:T(2,128)}', space=vmem, size = 0x800, scoped, tag = 'scratch operand']
  #allocation3 [shape = 'f32[1,2,256]{2,1,0:T(2,128)}', space=vmem, size = 0x800, scoped, tag = 'scratch operand']
  %s0 = inlined_call_operand.hbm [shape: f32[2,2,256], index: 0, kind: input, shape index: {}]
  %s1 = inlined_call_operand.hbm [shape: f32[2,2,256], index: 1, kind: input, shape index: {}]
  %s2 = inlined_call_operand.hbm [shape: f32[2,1,128], index: 2, kind: output, shape index: {}]
  %s3 = sld [smem:[#allocation0]]
  $region57: #{tpu_custom_call.1} parent=0
    _
  %s5 = ssub.s32 1, %s3
  %s6 = scalar_select 0, %s5, %s3
  $region1: #{tpu_custom_call.1} parent=0
    #allocation4 [shape = 'u8[4096]{0}', space=vmem, size = 0x1000, scoped, tag = 'input window, operand 0']
    #allocation5 [shape = 's32[2]{0}', space=sflag, size = 0x8, scoped, tag = 'scoped memory for tpu_custom_call.1']
    #allocation6 [shape = 's32[2]{0}', space=sflag, size = 0x8, scoped, tag = 'scoped memory for tpu_custom_call.1']
    #allocation7 [shape = 'u8[4096]{0}', space=vmem, size = 0x1000, scoped, tag = 'input window, operand 1']
    #allocation8 [shape = 's32[2]{0}', space=sflag, size = 0x8, scoped, tag = 'scoped memory for tpu_custom_call.1']
    #allocation9 [shape = 'u8[1024]{0}', space=vmem, size = 0x400, scoped, tag = 'output window, operand 0']
    %7 = vsyncpa [#allocation5], 0
    %s8 = scalar_lea.sflag [#allocation5], 1
    %9 = vsyncpa %s8, 0
    %10 = vsyncpa [#allocation8], 0
    %s11 = scalar_lea.sflag [#allocation8], 1
    %12 = vsyncpa %s11, 0
    %13 = vsyncpa [#allocation6], 0
    %s14 = scalar_lea.sflag [#allocation6], 1
    %15 = vsyncpa %s14, 0
    loop: start=0, step=1, limit=4
    $region2: #{tpu_custom_call.1} parent=1 // loop_pre_header
      _
    $region3: #{tpu_custom_call.1} parent=1 // loop_header
      %s17 = sphi 0, %s21
      %p18 = scmp.ge.s32.totalorder %s17, 4
      %s24 = sphi 0, %s36
      %s25 = sphi 0, %s32
      %s26 = sphi 0, %s24
      %s27 = sphi 0, %s25
      %s28 = sphi 0, %s26
      %s29 = sphi 0, %s27
      %s41 = sphi 0, %s43
      %s44 = sphi 0, %s41
      %s45 = sphi 0, %s44
      %s61 = sphi 0, %s45
      %s69 = sphi 0, %s71
      %s72 = sphi 0, %s69
      %s73 = sphi 0, %s72
      %s89 = sphi 0, %s73
      %s95 = sphi 0, %s97
      %s98 = sphi 0, %s95
      %s99 = sphi 0, %s98
      %s115 = sphi 0, %s99
    $region4: #{tpu_custom_call.1} parent=1 // loop_header_branch
      %20 = sbr.rel (%p18) target = $region8
    $region5: #{tpu_custom_call.1} parent=1 // loop_body
      %s22 = ssub.s32 %s17, 1
      %s23 = ssub.s32 %s17, 2
      %s30 = sadd.s32 1, %s25
      %p31 = scmp.ge.s32.totalorder %s30, 1
      %s32 = scalar_select %p31, 0, %s30
      %s33 = sadd.s32 1, %s24
      %s34 = scalar_select %p31, %s33, %s24
      %p35 = scmp.ge.s32.totalorder %s34, 2
      %s36 = scalar_select %p35, 0, %s34
      %s37 = ssub.s32 %s24, %s36
      %s38 = ssub.s32 %s25, %s32
      %s39 = sor.u32 %s37, %s38
      %p40 = scmp.eq.s32.totalorder %s39, 0
      %s42 = sadd.s32 %s41, 1
      %s43 = scalar_select %p40, %s41, %s42
      %p46 = pneg %p40
      %p47 = scmp.eq.s32.totalorder %s17, 1
      %p48 = por %p46, %p47
      %p49 = scmp.ne.s32.totalorder %s41, %s44
      %p50 = scmp.eq.s32.totalorder %s17, 0
      %p51 = por %p49, %p50
      %p52 = scmp.ne.s32.totalorder %s41, %s44
      %p53 = scmp.eq.s32.totalorder %s22, 1
      %p54 = por %p52, %p53
      %p55 = scmp.ne.s32.totalorder %s44, %s45
      %p56 = scmp.eq.s32.totalorder %s22, 0
      %p57 = por %p55, %p56
      %p58 = scmp.ne.s32.totalorder %s44, %s45
      %p59 = scmp.eq.s32.totalorder %s23, 1
      %p60 = por %p58, %p59
      %p62 = scmp.ne.s32.totalorder %s45, %s61
      %p63 = scmp.eq.s32.totalorder %s23, 0
      %p64 = por %p62, %p63
      %s65 = ssub.s32 %s24, %s36
      %s66 = ssub.s32 %s25, %s32
      %s67 = sor.u32 %s65, %s66
      %p68 = scmp.eq.s32.totalorder %s67, 0
      %s70 = sadd.s32 %s69, 1
      %s71 = scalar_select %p68, %s69, %s70
      %p74 = pneg %p68
      %p75 = scmp.eq.s32.totalorder %s17, 1
      %p76 = por %p74, %p75
      %p77 = scmp.ne.s32.totalorder %s69, %s72
      %p78 = scmp.eq.s32.totalorder %s17, 0
      %p79 = por %p77, %p78
      %p80 = scmp.ne.s32.totalorder %s69, %s72
      %p81 = scmp.eq.s32.totalorder %s22, 1
      %p82 = por %p80, %p81
      %p83 = scmp.ne.s32.totalorder %s72, %s73
      %p84 = scmp.eq.s32.totalorder %s22, 0
      %p85 = por %p83, %p84
      %p86 = scmp.ne.s32.totalorder %s72, %s73
      %p87 = scmp.eq.s32.totalorder %s23, 1
      %p88 = por %p86, %p87
      %p90 = scmp.ne.s32.totalorder %s73, %s89
      %p91 = scmp.eq.s32.totalorder %s23, 0
      %p92 = por %p90, %p91
      %s93 = ssub.s32 %s24, %s36
      %p94 = scmp.eq.s32.totalorder %s93, 0
      %s96 = sadd.s32 %s95, 1
      %s97 = scalar_select %p94, %s95, %s96
      %p100 = pneg %p94
      %p101 = scmp.eq.s32.totalorder %s17, 1
      %p102 = por %p100, %p101
      %p103 = scmp.ne.s32.totalorder %s95, %s98
      %p104 = scmp.eq.s32.totalorder %s17, 0
      %p105 = por %p103, %p104
      %p106 = scmp.ne.s32.totalorder %s95, %s98
      %p107 = scmp.eq.s32.totalorder %s22, 1
      %p108 = por %p106, %p107
      %p109 = scmp.ne.s32.totalorder %s98, %s99
      %p110 = scmp.eq.s32.totalorder %s22, 0
      %p111 = por %p109, %p110
      %p112 = scmp.ne.s32.totalorder %s98, %s99
      %p113 = scmp.eq.s32.totalorder %s23, 1
      %p114 = por %p112, %p113
      %p116 = scmp.ne.s32.totalorder %s99, %s115
      %p117 = scmp.eq.s32.totalorder %s23, 0
      %p118 = por %p116, %p117
      %p119 = scmp.le.s32.totalorder 1, %s17
      %p120 = scmp.lt.s32.totalorder %s17, 3
      %p121 = pnand %p119, %p120
      %p122 = pneg %p121
      // Predicated region
      $region9: #{tpu_custom_call.1} parent=5 // pred_check
        _
      $region10: #{tpu_custom_call.1} parent=5 // pred_check_branch
        %124 = sbr.rel (%p121) target = $region12
      $region11: #{tpu_custom_call.1} parent=5 // pred_region
        %s125 = ssub.s32 %s17, 1
      $region12: #{tpu_custom_call.1} parent=5 // pred_fallthru
        _
      %p126 = scmp.lt.s32.totalorder %s17, 2
      // Predicated region
      $region13: #{tpu_custom_call.1} parent=5 // pred_check
        %p127 = pneg %p126
      $region14: #{tpu_custom_call.1} parent=5 // pred_check_branch
        %129 = sbr.rel (%p127) target = $region16
      $region15: #{tpu_custom_call.1} parent=5 // pred_region
        // Predicated region
        $region17: #{tpu_custom_call.1} parent=15 // pred_check
          %p130 = pneg %p51
        $region18: #{tpu_custom_call.1} parent=15 // pred_check_branch
          %132 = sbr.rel (%p130) target = $region20
        $region19: #{tpu_custom_call.1} parent=15 // pred_region
          %s133 = sand.u32 %s41, 1
          %s134 = scalar_lea.sflag [#allocation5], %s133
          %s135 = sand.u32 %s41, 1
          %s136 = smul.addr %s135, 4
          %s137 = scalar_lea.vmem [#allocation4], %s136
          %s138 = smul.u32 2, %s25
          %s140 = ssub.s32 64, 64
          %141 = vsyncadd %s134, %s140
          %s142 = smul.addr %s24, 2
          %s143 = sadd.s32 %s138, %s142
          %s144 = smul.addr %s143, 32
          %s145 = scalar_lea.hbm %s0, %s144
          %s147 = sshll.u32 %s137, 4
          %s148 = int_to_ptr.vmem [resolvable:$true] %s147
          %150 = dma.hbm_to_vmem [thread:$0]  %s145, 64, %s148, %s134
        $region20: #{tpu_custom_call.1} parent=15 // pred_fallthru
          _
        // Predicated region
        $region21: #{tpu_custom_call.1} parent=15 // pred_check
          %p151 = pneg %p79
        $region22: #{tpu_custom_call.1} parent=15 // pred_check_branch
          %153 = sbr.rel (%p151) target = $region24
        $region23: #{tpu_custom_call.1} parent=15 // pred_region
          %s154 = sand.u32 %s69, 1
          %s155 = scalar_lea.sflag [#allocation8], %s154
          %s156 = sand.u32 %s69, 1
          %s157 = smul.addr %s156, 4
          %s158 = scalar_lea.vmem [#allocation7], %s157
          %s159 = smul.u32 2, %s25
          %s161 = ssub.s32 64, 64
          %162 = vsyncadd %s155, %s161
          %s163 = smul.addr %s24, 2
          %s164 = sadd.s32 %s159, %s163
          %s165 = smul.addr %s164, 32
          %s166 = scalar_lea.hbm %s1, %s165
          %s168 = sshll.u32 %s158, 4
          %s169 = int_to_ptr.vmem [resolvable:$true] %s168
          %171 = dma.hbm_to_vmem [thread:$0]  %s166, 64, %s169, %s155
        $region24: #{tpu_custom_call.1} parent=15 // pred_fallthru
          _
      $region16: #{tpu_custom_call.1} parent=5 // pred_fallthru
        _
      %p172 = scmp.le.s32.totalorder 1, %s17
      %p173 = scmp.lt.s32.totalorder %s17, 3
      %p174 = pnand %p172, %p173
      %p175 = pneg %p174
      // Predicated region
      $region25: #{tpu_custom_call.1} parent=5 // pred_check
        _
      $region26: #{tpu_custom_call.1} parent=5 // pred_check_branch
        %177 = sbr.rel (%p174) target = $region28
      $region27: #{tpu_custom_call.1} parent=5 // pred_region
        %s178 = ssub.s32 %s17, 1
        %s179 = sand.u32 %s44, 1
        %s180 = scalar_lea.sflag [#allocation5], %s179
        %s181 = sand.u32 %s44, 1
        %s182 = smul.addr %s181, 4
        %s183 = scalar_lea.vmem [#allocation4], %s182
        // Predicated region
        $region29: #{tpu_custom_call.1} parent=27 // pred_check
          %p184 = pneg %p57
        $region30: #{tpu_custom_call.1} parent=27 // pred_check_branch
          %186 = sbr.rel (%p184) target = $region32
        $region31: #{tpu_custom_call.1} parent=27 // pred_region
          %187 = dma.done %s180, 64
        $region32: #{tpu_custom_call.1} parent=27 // pred_fallthru
          _
        %s188 = sand.u32 %s72, 1
        %s189 = scalar_lea.sflag [#allocation8], %s188
        %s190 = sand.u32 %s72, 1
        %s191 = smul.addr %s190, 4
        %s192 = scalar_lea.vmem [#allocation7], %s191
        // Predicated region
        $region33: #{tpu_custom_call.1} parent=27 // pred_check
          %p193 = pneg %p85
        $region34: #{tpu_custom_call.1} parent=27 // pred_check_branch
          %195 = sbr.rel (%p193) target = $region36
        $region35: #{tpu_custom_call.1} parent=27 // pred_region
          %196 = dma.done %s189, 64
        $region36: #{tpu_custom_call.1} parent=27 // pred_fallthru
          _
        %s197 = sand.u32 %s44, 1
        %s198 = scalar_lea.sflag [#allocation5], %s197
        %s199 = sand.u32 %s44, 1
        %s200 = smul.addr %s199, 4
        %s201 = scalar_lea.vmem [#allocation4], %s200
        %p202 = pneg %p57
        %p203 = pneg %p54
        %s204 = sand.u32 %s72, 1
        %s205 = scalar_lea.sflag [#allocation8], %s204
        %s206 = sand.u32 %s72, 1
        %s207 = smul.addr %s206, 4
        %s208 = scalar_lea.vmem [#allocation7], %s207
        %p209 = pneg %p85
        %p210 = pneg %p82
        %p211 = pneg %p111
        %p212 = pneg %p108
        %s213 = sand.u32 %s98, 1
        %s214 = scalar_lea.sflag [#allocation6], %s213
        %s215 = sand.u32 %s98, 1
        %s216 = scalar_lea.vmem [#allocation9], %s215
        %s217 = smul.u32 2, %s27
        %s218 = smul.u32 2, %s27
        %p219 = scmp.eq.s32.totalorder %s27, 0
        // Predicated region
        $region37: #{tpu_custom_call.1} parent=27 // pred_check
          %p220 = pneg %p219
        $region38: #{tpu_custom_call.1} parent=27 // pred_check_branch
          %222 = sbr.rel (%p220) target = $region40
        $region39: #{tpu_custom_call.1} parent=27 // pred_region
          %223 = vst [vmem:[#allocation2] sm:$0xf] 0.0
          %224 = vst [vmem:[#allocation3] sm:$0xf] 0.0
        $region40: #{tpu_custom_call.1} parent=27 // pred_fallthru
          _
        %v225 = vld [vmem:[%s192] sm:$0xf]
        %v226 = vld [vmem:[%s183] sm:$0xf]
        %v227 = vsub.f32 %v225, 0.5
        %v228 = vsub.f32 %v225, %v226
        %v229 = vld [vmem:[#allocation2] sm:$0xf]
        %v230 = vmul.f32 %v227, %v227
        %v231 = vadd.f32 %v229, %v230
        %232 = vst [vmem:[#allocation2] sm:$0xf] %v231
        %v233 = vld [vmem:[#allocation3] sm:$0xf]
        %v234 = vmul.f32 %v228, %v228
        %v235 = vadd.f32 %v233, %v234
        %236 = vst [vmem:[#allocation3] sm:$0xf] %v235
        // Predicated region
        $region41: #{tpu_custom_call.1} parent=27 // pred_check
          %p237 = pneg %p219
        $region42: #{tpu_custom_call.1} parent=27 // pred_check_branch
          %239 = sbr.rel (%p237) target = $region44
        $region43: #{tpu_custom_call.1} parent=27 // pred_region
          %v240 = vld [vmem:[#allocation2] sm:$0xf]
          %v243 = vunpack.c.l.s4 1983009808
          %v244 = vunpack.c.0.s8 %v243
          %v245 = vlaneseq
          %v246 = vshrl.u32 %v245, 7
          %v247 = vsub.s32 %v244, %v246
          %v248 = vrot.slane %v240, %v247
          %v249 = vcombine.high %v248, %v248
          %vm252 = vcmask 1041408
          %v253 = vsel %vm252, %v248, 0.0
          %v254 = vsel %vm252, %v249, 0.0
          %v255 = vadd.f32 %v253, %v254
          %256 = vadd.xlane.f32.xlu0 %v255
          %v257 = vpop.xlane.xlu0 %256
          %v258 = vrot.slane %v257, 4
          %v259 = vadd.f32 %v257, %v258
          %v260 = vrot.slane %v259, 2
          %v261 = vadd.f32 %v259, %v260
          %v262 = vrot.slane %v261, 1
          %v263 = vadd.f32 %v261, %v262
          %s264 = vtos %v263
          %v265 = vld [vmem:[#allocation3] sm:$0xf]
          %v268 = vunpack.c.l.s4 1983009808
          %v269 = vunpack.c.0.s8 %v268
          %v270 = vlaneseq
          %v271 = vshrl.u32 %v270, 7
          %v272 = vsub.s32 %v269, %v271
          %v273 = vrot.slane %v265, %v272
          %v274 = vcombine.high %v273, %v273
          %v277 = vsel %vm252, %v273, 0.0
          %v278 = vsel %vm252, %v274, 0.0
          %v279 = vadd.f32 %v277, %v278
          %280 = vadd.xlane.f32.xlu0 %v279
          %v281 = vpop.xlane.xlu0 %280
          %v282 = vrot.slane %v281, 4
          %v283 = vadd.f32 %v281, %v282
          %v284 = vrot.slane %v283, 2
          %v285 = vadd.f32 %v283, %v284
          %v286 = vrot.slane %v285, 1
          %v287 = vadd.f32 %v285, %v286
          %s288 = vtos %v287
          %v289 = vstv %s264
          %v290 = vrcp.pop %v289
          %s291 = vtos %v290
          %s292 = smul.f32 %s288, %s291
          %v293 = vstv %s292
          %294 = vst [vmem:[%s216] sm:$0x1] %v293
        $region44: #{tpu_custom_call.1} parent=27 // pred_fallthru
          _
        %s295 = sand.u32 %s98, 1
        %s296 = scalar_lea.sflag [#allocation6], %s295
        %s297 = sand.u32 %s98, 1
        %s298 = scalar_lea.vmem [#allocation9], %s297
        // Predicated region
        $region45: #{tpu_custom_call.1} parent=27 // pred_check
          %p299 = pneg %p108
        $region46: #{tpu_custom_call.1} parent=27 // pred_check_branch
          %301 = sbr.rel (%p299) target = $region48
        $region47: #{tpu_custom_call.1} parent=27 // pred_region
          %s303 = ssub.s32 16, 16
          %304 = vsyncadd %s296, %s303
          %s305 = smul.addr %s26, 16
          %s306 = scalar_lea.hbm %s2, %s305
          %s308 = sshll.u32 %s298, 4
          %s309 = int_to_ptr.vmem [resolvable:$true] %s308
          %311 = dma.vmem_to_hbm [thread:$0]  %s309, 16, %s306, %s296
        $region48: #{tpu_custom_call.1} parent=27 // pred_fallthru
          _
      $region28: #{tpu_custom_call.1} parent=5 // pred_fallthru
        _
      %p312 = scmp.le.s32.totalorder 2, %s17
      // Predicated region
      $region49: #{tpu_custom_call.1} parent=5 // pred_check
        %p313 = pneg %p312
      $region50: #{tpu_custom_call.1} parent=5 // pred_check_branch
        %315 = sbr.rel (%p313) target = $region52
      $region51: #{tpu_custom_call.1} parent=5 // pred_region
        %s316 = ssub.s32 %s17, 2
        // Predicated region
        $region53: #{tpu_custom_call.1} parent=51 // pred_check
          %p317 = pneg %p114
        $region54: #{tpu_custom_call.1} parent=51 // pred_check_branch
          %319 = sbr.rel (%p317) target = $region56
        $region55: #{tpu_custom_call.1} parent=51 // pred_region
          %s320 = sand.u32 %s99, 1
          %s321 = scalar_lea.sflag [#allocation6], %s320
          %s322 = sand.u32 %s99, 1
          %s323 = scalar_lea.vmem [#allocation9], %s322
          %324 = dma.done %s321, 16
        $region56: #{tpu_custom_call.1} parent=51 // pred_fallthru
          _
      $region52: #{tpu_custom_call.1} parent=5 // pred_fallthru
        _
    $region6: #{tpu_custom_call.1} parent=1 // loop_footer
      %s21 = sadd.s32 1, %s17
    $region7: #{tpu_custom_call.1} parent=1 // loop_footer_branch
      %16 = sbr.rel target = $region3
    $region8: #{tpu_custom_call.1} parent=1 // loop_exit
      _
    %325 = vsyncpa [#allocation5], 1
    %s326 = scalar_lea.sflag [#allocation5], 1
    %327 = vsyncpa %s326, 1
    %328 = vsyncpa [#allocation8], 1
    %s329 = scalar_lea.sflag [#allocation8], 1
    %330 = vsyncpa %s329, 1
    %331 = vsyncpa [#allocation6], 1
    %s332 = scalar_lea.sflag [#allocation6], 1
    %333 = vsyncpa %s332, 1

</llo_original>
